<compile_context>
chip_gen: v7x
topology: tpu7x:2x2x1
jax: 0.10.0
libtpu: 0.0.40
codegen_flags: <defaults>
</compile_context>

<pallas_src>
import functools

import numpy as np
import jax
import jax.numpy as jnp
from jax.experimental import pallas as pl
from jax.experimental.pallas import tpu as pltpu

_LANE = 128
# Padded bytes of live (double-buffered) blocks per grid step.  Safe on every
# generation (v7x: 64 MiB physical / 32 MiB scoped; v5e/v6e: 128 MiB physical).
_DEFAULT_VMEM_BUDGET = 16 * 1024 * 1024


def _round_up(a, b):
    return (a + b - 1) // b * b


def _sublane_multiple(dtype):
    # Minimum second-minor tile per dtype: f32 -> 8, bf16 -> 16, int8/fp8 -> 32.
    return {4: 8, 2: 16, 1: 32}[jnp.dtype(dtype).itemsize]


def _pool_block_kernel(x_ref, o_ref, *, kh, kw, sw):
    """x_ref: (T, kh, Wn) with Wn == sw*kw  ->  o_ref: (T, sw).

    Non-overlapping max pool: reduce the kh input rows first with element-wise
    VPU maxima on lane-dense (T, Wn) slabs, then reduce each output window's
    kw adjacent lanes on the already row-reduced data.
    """
    m = x_ref[:, 0, :]
    for j in range(1, kh):
        m = jnp.maximum(m, x_ref[:, j, :])
    if kw == 1:
        o_ref[...] = m
    else:
        for w in range(sw):
            o_ref[:, w:w + 1] = jnp.max(
                m[:, w * kw:(w + 1) * kw], axis=-1, keepdims=True)


def _block_pool_pallas(x3, sw, kh, kw, *, vmem_budget=_DEFAULT_VMEM_BUDGET):
    """Row-blocked pooling. x3: (R, kh, Wn) with Wn == sw*kw -> (R, sw)."""
    R, _, Wn = x3.shape
    itemsize = jnp.dtype(x3.dtype).itemsize
    mult = _sublane_multiple(x3.dtype)

    # Per-row VMEM footprint of the double-buffered input + output blocks,
    # using the padded (sublane, 128-lane) tiles actually resident in VMEM.
    in_row = _round_up(kh, mult) * _round_up(Wn, _LANE) * itemsize
    out_row = _round_up(sw, _LANE) * itemsize
    per_row = 2 * (in_row + out_row)

    t_r = max(vmem_budget // per_row, 1)
    t_r = max((t_r // mult) * mult, mult)
    if R >= 2 * mult:
        # Keep at least two grid steps so v7x's two TensorCores both get work.
        t_r = min(t_r, _round_up(pl.cdiv(R, 2), mult))
    if t_r >= R:
        t_r = R  # full extent is always a legal block dim

    kernel = functools.partial(_pool_block_kernel, kh=kh, kw=kw, sw=sw)
    return pl.pallas_call(
        kernel,
        out_shape=jax.ShapeDtypeStruct((R, sw), x3.dtype),
        grid=(pl.cdiv(R, t_r),),
        # Last two block dims equal the full array dims (kh, Wn) -> layout-legal
        # regardless of the (8,128) divisibility rule.
        in_specs=[pl.BlockSpec((t_r, kh, Wn), lambda i: (i, 0, 0))],
        out_specs=pl.BlockSpec((t_r, sw), lambda i: (i, 0)),
        compiler_params=pltpu.CompilerParams(
            dimension_semantics=("parallel",),
            vmem_limit_bytes=32 * 1024 * 1024),
    )(x3)


def _nearest_resize_nchw(x, out_hw):
    # Replicates F.interpolate(mode='nearest'): src_idx = floor(dst * in / out).
    # TODO(synk): pure gather glue stays in XLA; not worth a Pallas kernel here.
    N, C, H, W = x.shape
    Ho, Wo = out_hw
    hi = (jnp.arange(Ho) * H // Ho).astype(jnp.int32)
    wi = (jnp.arange(Wo) * W // Wo).astype(jnp.int32)
    return x[:, :, hi[:, None], wi[None, :]]


def _pool_geometry(x_shape, size):
    """Mirrors the numpy math in the PyTorch module's forward()."""
    size = np.array(size)
    in_size = np.array(x_shape[2:])
    needs_resize = bool(in_size[0] % size[0] or in_size[1] % size[1])
    if in_size[0] % size[0]:
        in_size[0] = (in_size[0] // size[0] + 1) * size[0]
    if in_size[1] % size[1]:
        in_size[1] = (in_size[1] // size[1] + 1) * size[1]
    stride = np.floor(in_size / size).astype(np.int64)
    kernel = in_size - (size - 1) * stride
    # After the resize, in_size % size == 0, so kernel == stride (non-overlap).
    assert np.all(kernel == stride)
    return needs_resize, (int(in_size[0]), int(in_size[1])), \
        (int(kernel[0]), int(kernel[1])), (int(size[0]), int(size[1]))


def adaptive_maxpool2d(x, size, *, vmem_budget=_DEFAULT_VMEM_BUDGET):
    """Pallas equivalent of the PyTorch `adaptivemaxpool2d(size)(x)` forward."""
    N, C = x.shape[0], x.shape[1]
    needs_resize, (Hn, Wn), (kh, kw), (sh, sw) = _pool_geometry(x.shape, size)
    if needs_resize:
        x = _nearest_resize_nchw(x, (Hn, Wn))
    # Free reshape (row-major split/merge only): (N, C, sh*kh, Wn) -> (N*C*sh, kh, Wn).
    x3 = x.reshape(N * C * sh, kh, Wn)
    out = _block_pool_pallas(x3, sw, kh, kw, vmem_budget=vmem_budget)
    return out.reshape(N, C, sh, sw)


def _reference(x, size):
    """Pure-JAX reference mirroring torch F.interpolate + F.max_pool2d."""
    N, C = x.shape[0], x.shape[1]
    needs_resize, (Hn, Wn), (kh, kw), (sh, sw) = _pool_geometry(x.shape, size)
    if needs_resize:
        x = _nearest_resize_nchw(x, (Hn, Wn))
    return jnp.max(x.reshape(N, C, sh, kh, sw, kw), axis=(3, 5))


if __name__ == "__main__":
    key = jax.random.PRNGKey(0)
    x = jax.random.normal(key, (2, 4, 16, 16), dtype=jnp.float32)

    # Divisible path: 16x16 -> 4x4 (no interpolation branch; kh=kw=4).
    y = adaptive_maxpool2d(x, (4, 4))
    jax.block_until_ready(y)
    assert y.shape == (2, 4, 4, 4)
    np.testing.assert_array_equal(np.asarray(y), np.asarray(_reference(x, (4, 4))))

    # Non-divisible path: 16x16 -> 3x5 (nearest-resize branch, kh=6, kw=4).
    y2 = adaptive_maxpool2d(x, (3, 5))
    jax.block_until_ready(y2)
    assert y2.shape == (2, 4, 3, 5)
    np.testing.assert_array_equal(np.asarray(y2), np.asarray(_reference(x, (3, 5))))

    # bfloat16 path (exercises the 16-sublane dtype tile multiple).
    xb = x.astype(jnp.bfloat16)
    yb = adaptive_maxpool2d(xb, (4, 4))
    jax.block_until_ready(yb)
    np.testing.assert_array_equal(
        np.asarray(yb.astype(jnp.float32)),
        np.asarray(_reference(xb, (4, 4)).astype(jnp.float32)))

    # Multi-step grid with a partial tail block (tiny VMEM budget on purpose).
    x3 = jax.random.normal(jax.random.PRNGKey(1), (3, 4, 16, 16), jnp.float32)
    y3 = adaptive_maxpool2d(x3, (3, 5), vmem_budget=2048)
    jax.block_until_ready(y3)
    assert y3.shape == (3, 4, 3, 5)
    np.testing.assert_array_equal(np.asarray(y3), np.asarray(_reference(x3, (3, 5))))

    print("KERNEL_OK")
</pallas_src>

<mosaic_0001>
module attributes {stable_mosaic.version = 11 : i64} {
  func.func @_pool_block_kernel(%arg0: i32, %arg1: memref<16x4x16xf32, #tpu.memory_space<vmem>>, %arg2: memref<16x4xf32, #tpu.memory_space<vmem>>) attributes {dimension_semantics = [#tpu.dimension_semantics<parallel>], iteration_bounds = array<i64: 2>, scalar_prefetch = 0 : i64, scratch_operands = 0 : i64, tpu.core_type = #tpu.core_type<tc>, window_params = [{transform_indices = @transform_0, window_bounds = array<i64: 16, 4, 16>}, {transform_indices = @transform_1, window_bounds = array<i64: 16, 4>}]} {
    %c0 = arith.constant 0 : index
    %c0_0 = arith.constant 0 : index
    %c0_1 = arith.constant 0 : index
    %0 = vector.load %arg1[%c0, %c0_0, %c0_1] : memref<16x4x16xf32, #tpu.memory_space<vmem>>, vector<16x1x16xf32>
    %1 = vector.shape_cast %0 : vector<16x1x16xf32> to vector<16x16xf32>
    %c0_2 = arith.constant 0 : index
    %c1 = arith.constant 1 : index
    %c0_3 = arith.constant 0 : index
    %2 = vector.load %arg1[%c0_2, %c1, %c0_3] : memref<16x4x16xf32, #tpu.memory_space<vmem>>, vector<16x1x16xf32>
    %3 = vector.shape_cast %2 : vector<16x1x16xf32> to vector<16x16xf32>
    %4 = arith.maximumf %1, %3 : vector<16x16xf32>
    %c0_4 = arith.constant 0 : index
    %c2 = arith.constant 2 : index
    %c0_5 = arith.constant 0 : index
    %5 = vector.load %arg1[%c0_4, %c2, %c0_5] : memref<16x4x16xf32, #tpu.memory_space<vmem>>, vector<16x1x16xf32>
    %6 = vector.shape_cast %5 : vector<16x1x16xf32> to vector<16x16xf32>
    %7 = arith.maximumf %4, %6 : vector<16x16xf32>
    %c0_6 = arith.constant 0 : index
    %c3 = arith.constant 3 : index
    %c0_7 = arith.constant 0 : index
    %8 = vector.load %arg1[%c0_6, %c3, %c0_7] : memref<16x4x16xf32, #tpu.memory_space<vmem>>, vector<16x1x16xf32>
    %9 = vector.shape_cast %8 : vector<16x1x16xf32> to vector<16x16xf32>
    %10 = arith.maximumf %7, %9 : vector<16x16xf32>
    %11 = vector.extract_strided_slice %10 {offsets = [0, 0], sizes = [16, 4], strides = [1, 1]} : vector<16x16xf32> to vector<16x4xf32>
    %cst = arith.constant dense<0xFF800000> : vector<16xf32>
    %12 = vector.multi_reduction <maximumf>, %11, %cst [1] : vector<16x4xf32> to vector<16xf32>
    %13 = vector.shape_cast %12 : vector<16xf32> to vector<16x1xf32>
    %c0_8 = arith.constant 0 : index
    %c0_9 = arith.constant 0 : index
    %14 = vector.load %arg2[%c0_8, %c0_9] : memref<16x4xf32, #tpu.memory_space<vmem>>, vector<16x1xf32>
    tpu.vector_store %arg2[%c0_8, %c0_9], %13 {strides = array<i32>} : memref<16x4xf32, #tpu.memory_space<vmem>>, vector<16x1xf32>,
    %15 = vector.extract_strided_slice %10 {offsets = [0, 4], sizes = [16, 4], strides = [1, 1]} : vector<16x16xf32> to vector<16x4xf32>
    %cst_10 = arith.constant dense<0xFF800000> : vector<16xf32>
    %16 = vector.multi_reduction <maximumf>, %15, %cst_10 [1] : vector<16x4xf32> to vector<16xf32>
    %17 = vector.shape_cast %16 : vector<16xf32> to vector<16x1xf32>
    %c0_11 = arith.constant 0 : index
    %c1_12 = arith.constant 1 : index
    %18 = vector.load %arg2[%c0_11, %c1_12] : memref<16x4xf32, #tpu.memory_space<vmem>>, vector<16x1xf32>
    tpu.vector_store %arg2[%c0_11, %c1_12], %17 {strides = array<i32>} : memref<16x4xf32, #tpu.memory_space<vmem>>, vector<16x1xf32>,
    %19 = vector.extract_strided_slice %10 {offsets = [0, 8], sizes = [16, 4], strides = [1, 1]} : vector<16x16xf32> to vector<16x4xf32>
    %cst_13 = arith.constant dense<0xFF800000> : vector<16xf32>
    %20 = vector.multi_reduction <maximumf>, %19, %cst_13 [1] : vector<16x4xf32> to vector<16xf32>
    %21 = vector.shape_cast %20 : vector<16xf32> to vector<16x1xf32>
    %c0_14 = arith.constant 0 : index
    %c2_15 = arith.constant 2 : index
    %22 = vector.load %arg2[%c0_14, %c2_15] : memref<16x4xf32, #tpu.memory_space<vmem>>, vector<16x1xf32>
    tpu.vector_store %arg2[%c0_14, %c2_15], %21 {strides = array<i32>} : memref<16x4xf32, #tpu.memory_space<vmem>>, vector<16x1xf32>,
    %23 = vector.extract_strided_slice %10 {offsets = [0, 12], sizes = [16, 4], strides = [1, 1]} : vector<16x16xf32> to vector<16x4xf32>
    %cst_16 = arith.constant dense<0xFF800000> : vector<16xf32>
    %24 = vector.multi_reduction <maximumf>, %23, %cst_16 [1] : vector<16x4xf32> to vector<16xf32>
    %25 = vector.shape_cast %24 : vector<16xf32> to vector<16x1xf32>
    %c0_17 = arith.constant 0 : index
    %c3_18 = arith.constant 3 : index
    %26 = vector.load %arg2[%c0_17, %c3_18] : memref<16x4xf32, #tpu.memory_space<vmem>>, vector<16x1xf32>
    tpu.vector_store %arg2[%c0_17, %c3_18], %25 {strides = array<i32>} : memref<16x4xf32, #tpu.memory_space<vmem>>, vector<16x1xf32>,
    return
  }
  func.func @transform_0(%arg0: i32) -> (i32, i32, i32) {
    %c0_i32 = arith.constant 0 : i32
    %c0_i32_0 = arith.constant 0 : i32
    %c0_i32_1 = arith.constant 0 : i32
    return %arg0, %c0_i32, %c0_i32_0 : i32, i32, i32
  }
  func.func @transform_1(%arg0: i32) -> (i32, i32) {
    %c0_i32 = arith.constant 0 : i32
    %c0_i32_0 = arith.constant 0 : i32
    return %arg0, %c0_i32 : i32, i32
  }
}

</mosaic_0001>

<llo_original>
// kernel: tpu_custom_call.1
$region0: #{tpu_custom_call.1}
  #allocation0 [shape = 'u32[]', space=smem, size = 0x4, offset = 0x4, fixed_abs, tag = 'smem constant byte address 0x4 - core index']
  #allocation1 [shape = 'u32[144,128]{1,0:T(1,128)}', space=vmem, size = 0x12000, scoped, tag = 'internal scratch']
  %s0 = inlined_call_operand.vmem [shape: f32[32,4,16], index: 0, kind: input, shape index: {}]
  %s1 = inlined_call_operand.vmem [shape: f32[32,4], index: 1, kind: output, shape index: {}]
  %s2 = sld [smem:[#allocation0]]
  $region37: #{tpu_custom_call.1} parent=0
    _
  %s4 = ssub.s32 1, %s2
  %s5 = scalar_select 0, %s4, %s2
  loop: start=0, step=1, limit=4
  $region2: #{tpu_custom_call.1} parent=0 // loop_pre_header
    _
  $region3: #{tpu_custom_call.1} parent=0 // loop_header
    %s7 = sphi 0, %s11
    %p8 = scmp.ge.s32.totalorder %s7, 4
    %s17 = sphi 0, %s19
    %s20 = sphi 0, %s17
    %s21 = sphi 0, %s20
    %s37 = sphi 0, %s21
    %s43 = sphi 0, %s45
    %s46 = sphi 0, %s43
    %s47 = sphi 0, %s46
    %s63 = sphi 0, %s47
  $region4: #{tpu_custom_call.1} parent=0 // loop_header_branch
    %10 = sbr.rel (%p8) target = $region8
  $region5: #{tpu_custom_call.1} parent=0 // loop_body
    %s12 = ssub.s32 %s7, 1
    %s13 = ssub.s32 %s7, 2
    %s14 = sadd.s32 %s7, 1
    %s15 = ssub.s32 %s7, %s14
    %p16 = scmp.eq.s32.totalorder %s15, 0
    %s18 = sadd.s32 %s17, 1
    %s19 = scalar_select %p16, %s17, %s18
    %p22 = pneg %p16
    %p23 = scmp.eq.s32.totalorder %s7, 1
    %p24 = por %p22, %p23
    %p25 = scmp.ne.s32.totalorder %s17, %s20
    %p26 = scmp.eq.s32.totalorder %s7, 0
    %p27 = por %p25, %p26
    %p28 = scmp.ne.s32.totalorder %s17, %s20
    %p29 = scmp.eq.s32.totalorder %s12, 1
    %p30 = por %p28, %p29
    %p31 = scmp.ne.s32.totalorder %s20, %s21
    %p32 = scmp.eq.s32.totalorder %s12, 0
    %p33 = por %p31, %p32
    %p34 = scmp.ne.s32.totalorder %s20, %s21
    %p35 = scmp.eq.s32.totalorder %s13, 1
    %p36 = por %p34, %p35
    %p38 = scmp.ne.s32.totalorder %s21, %s37
    %p39 = scmp.eq.s32.totalorder %s13, 0
    %p40 = por %p38, %p39
    %s41 = ssub.s32 %s7, %s14
    %p42 = scmp.eq.s32.totalorder %s41, 0
    %s44 = sadd.s32 %s43, 1
    %s45 = scalar_select %p42, %s43, %s44
    %p48 = pneg %p42
    %p49 = scmp.eq.s32.totalorder %s7, 1
    %p50 = por %p48, %p49
    %p51 = scmp.ne.s32.totalorder %s43, %s46
    %p52 = scmp.eq.s32.totalorder %s7, 0
    %p53 = por %p51, %p52
    %p54 = scmp.ne.s32.totalorder %s43, %s46
    %p55 = scmp.eq.s32.totalorder %s12, 1
    %p56 = por %p54, %p55
    %p57 = scmp.ne.s32.totalorder %s46, %s47
    %p58 = scmp.eq.s32.totalorder %s12, 0
    %p59 = por %p57, %p58
    %p60 = scmp.ne.s32.totalorder %s46, %s47
    %p61 = scmp.eq.s32.totalorder %s13, 1
    %p62 = por %p60, %p61
    %p64 = scmp.ne.s32.totalorder %s47, %s63
    %p65 = scmp.eq.s32.totalorder %s13, 0
    %p66 = por %p64, %p65
    %p67 = scmp.le.s32.totalorder 1, %s7
    %p68 = scmp.lt.s32.totalorder %s7, 3
    %p69 = pnand %p67, %p68
    %p70 = pneg %p69
    // Predicated region
    $region9: #{tpu_custom_call.1} parent=5 // pred_check
      _
    $region10: #{tpu_custom_call.1} parent=5 // pred_check_branch
      %72 = sbr.rel (%p69) target = $region12
    $region11: #{tpu_custom_call.1} parent=5 // pred_region
      %s73 = ssub.s32 %s7, 1
    $region12: #{tpu_custom_call.1} parent=5 // pred_fallthru
      _
    %p74 = scmp.lt.s32.totalorder %s7, 2
    // Predicated region
    $region13: #{tpu_custom_call.1} parent=5 // pred_check
      %p75 = pneg %p74
    $region14: #{tpu_custom_call.1} parent=5 // pred_check_branch
      %77 = sbr.rel (%p75) target = $region16
    $region15: #{tpu_custom_call.1} parent=5 // pred_region
      // Predicated region
      $region17: #{tpu_custom_call.1} parent=15 // pred_check
        %p78 = pneg %p27
      $region18: #{tpu_custom_call.1} parent=15 // pred_check_branch
        %80 = sbr.rel (%p78) target = $region20
      $region19: #{tpu_custom_call.1} parent=15 // pred_region
        %s81 = smul.u32 16, %s7
        %p82 = scmp.lt.s32.totalorder %s81, 31
        %s83 = scalar_select %p82, %s81, 31
        %s84 = smul.addr %s83, 4
        %s85 = scalar_lea.vmem %s0, %s84
        %s86 = smul.u32 16, %s7
      $region20: #{tpu_custom_call.1} parent=15 // pred_fallthru
        _
    $region16: #{tpu_custom_call.1} parent=5 // pred_fallthru
      _
    %p87 = scmp.le.s32.totalorder 1, %s7
    %p88 = scmp.lt.s32.totalorder %s7, 3
    %p89 = pnand %p87, %p88
    %p90 = pneg %p89
    // Predicated region
    $region21: #{tpu_custom_call.1} parent=5 // pred_check
      _
    $region22: #{tpu_custom_call.1} parent=5 // pred_check_branch
      %92 = sbr.rel (%p89) target = $region24
    $region23: #{tpu_custom_call.1} parent=5 // pred_region
      %s93 = ssub.s32 %s7, 1
      %s94 = smul.u32 16, %s12
      %p95 = scmp.lt.s32.totalorder %s94, 31
      %s96 = scalar_select %p95, %s94, 31
      %s97 = smul.addr %s96, 4
      %s98 = scalar_lea.vmem %s0, %s97
      %p99 = pneg %p33
      %p100 = pneg %p30
      %p101 = pneg %p59
      %p102 = pneg %p56
      %s103 = smul.u32 2, %s12
      %p104 = scmp.lt.s32.totalorder %s103, 3
      %s105 = scalar_select %p104, %s103, 3
      %s106 = smul.addr %s105, 8
      %s107 = scalar_lea.vmem %s1, %s106
      %s108 = smul.u32 16, %s12
      %p109 = scmp.lt.s32.totalorder %s108, 31
      %s110 = scalar_select %p109, %s108, 31
      %s111 = smul.addr %s110, 4
      %s112 = scalar_lea.vmem %s0, %s111
      %s113 = smul.u32 16, %s12
      %s114 = smul.u32 2, %s12
      %p115 = scmp.lt.s32.totalorder %s114, 3
      %s116 = scalar_select %p115, %s114, 3
      %s117 = smul.addr %s116, 8
      %s118 = scalar_lea.vmem %s1, %s117
      %s119 = smul.u32 2, %s12
      %v120 = vld [vmem:[%s112] sm:$0x1]
      %v121 = vld [vmem:[%s112 + $0x4] sm:$0x1]
      %v122 = vld [vmem:[%s112 + $0x8] sm:$0x1]
      %v123 = vld [vmem:[%s112 + $0xc] sm:$0x1]
      %v124 = vld [vmem:[%s112 + $0x10] sm:$0x1]
      %v125 = vld [vmem:[%s112 + $0x14] sm:$0x1]
      %v126 = vld [vmem:[%s112 + $0x18] sm:$0x1]
      %v127 = vld [vmem:[%s112 + $0x1c] sm:$0x1]
      %v128 = vld [vmem:[%s112 + $0x20] sm:$0x1]
      %v129 = vld [vmem:[%s112 + $0x24] sm:$0x1]
      %v130 = vld [vmem:[%s112 + $0x28] sm:$0x1]
      %v131 = vld [vmem:[%s112 + $0x2c] sm:$0x1]
      %v132 = vld [vmem:[%s112 + $0x30] sm:$0x1]
      %v133 = vld [vmem:[%s112 + $0x34] sm:$0x1]
      %v134 = vld [vmem:[%s112 + $0x38] sm:$0x1]
      %v135 = vld [vmem:[%s112 + $0x3c] sm:$0x1]
      %v136 = vld [vmem:[%s112 + $0x1] sm:$0x1]
      %v137 = vld [vmem:[%s112 + $0x5] sm:$0x1]
      %v138 = vld [vmem:[%s112 + $0x9] sm:$0x1]
      %v139 = vld [vmem:[%s112 + $0xd] sm:$0x1]
      %v140 = vld [vmem:[%s112 + $0x11] sm:$0x1]
      %v141 = vld [vmem:[%s112 + $0x15] sm:$0x1]
      %v142 = vld [vmem:[%s112 + $0x19] sm:$0x1]
      %v143 = vld [vmem:[%s112 + $0x1d] sm:$0x1]
      %v144 = vld [vmem:[%s112 + $0x21] sm:$0x1]
      %v145 = vld [vmem:[%s112 + $0x25] sm:$0x1]
      %v146 = vld [vmem:[%s112 + $0x29] sm:$0x1]
      %v147 = vld [vmem:[%s112 + $0x2d] sm:$0x1]
      %v148 = vld [vmem:[%s112 + $0x31] sm:$0x1]
      %v149 = vld [vmem:[%s112 + $0x35] sm:$0x1]
      %v150 = vld [vmem:[%s112 + $0x39] sm:$0x1]
      %v151 = vld [vmem:[%s112 + $0x3d] sm:$0x1]
      %v152 = vmax.f32 %v120, %v136
      %v153 = vmax.f32 %v121, %v137
      %v154 = vmax.f32 %v122, %v138
      %v155 = vmax.f32 %v123, %v139
      %v156 = vmax.f32 %v124, %v140
      %v157 = vmax.f32 %v125, %v141
      %v158 = vmax.f32 %v126, %v142
      %v159 = vmax.f32 %v127, %v143
      %v160 = vmax.f32 %v128, %v144
      %v161 = vmax.f32 %v129, %v145
      %v162 = vmax.f32 %v130, %v146
      %v163 = vmax.f32 %v131, %v147
      %v164 = vmax.f32 %v132, %v148
      %v165 = vmax.f32 %v133, %v149
      %v166 = vmax.f32 %v134, %v150
      %v167 = vmax.f32 %v135, %v151
      %v168 = vld [vmem:[%s112 + $0x2] sm:$0x1]
      %v169 = vld [vmem:[%s112 + $0x6] sm:$0x1]
      %v170 = vld [vmem:[%s112 + $0xa] sm:$0x1]
      %v171 = vld [vmem:[%s112 + $0xe] sm:$0x1]
      %v172 = vld [vmem:[%s112 + $0x12] sm:$0x1]
      %v173 = vld [vmem:[%s112 + $0x16] sm:$0x1]
      %v174 = vld [vmem:[%s112 + $0x1a] sm:$0x1]
      %v175 = vld [vmem:[%s112 + $0x1e] sm:$0x1]
      %v176 = vld [vmem:[%s112 + $0x22] sm:$0x1]
      %v177 = vld [vmem:[%s112 + $0x26] sm:$0x1]
      %v178 = vld [vmem:[%s112 + $0x2a] sm:$0x1]
      %v179 = vld [vmem:[%s112 + $0x2e] sm:$0x1]
      %v180 = vld [vmem:[%s112 + $0x32] sm:$0x1]
      %v181 = vld [vmem:[%s112 + $0x36] sm:$0x1]
      %v182 = vld [vmem:[%s112 + $0x3a] sm:$0x1]
      %v183 = vld [vmem:[%s112 + $0x3e] sm:$0x1]
      %v184 = vmax.f32 %v152, %v168
      %v185 = vmax.f32 %v153, %v169
      %v186 = vmax.f32 %v154, %v170
      %v187 = vmax.f32 %v155, %v171
      %v188 = vmax.f32 %v156, %v172
      %v189 = vmax.f32 %v157, %v173
      %v190 = vmax.f32 %v158, %v174
      %v191 = vmax.f32 %v159, %v175
      %v192 = vmax.f32 %v160, %v176
      %v193 = vmax.f32 %v161, %v177
      %v194 = vmax.f32 %v162, %v178
      %v195 = vmax.f32 %v163, %v179
      %v196 = vmax.f32 %v164, %v180
      %v197 = vmax.f32 %v165, %v181
      %v198 = vmax.f32 %v166, %v182
      %v199 = vmax.f32 %v167, %v183
      %v200 = vld [vmem:[%s112 + $0x3] sm:$0x1]
      %v201 = vld [vmem:[%s112 + $0x7] sm:$0x1]
      %v202 = vld [vmem:[%s112 + $0xb] sm:$0x1]
      %v203 = vld [vmem:[%s112 + $0xf] sm:$0x1]
      %v204 = vld [vmem:[%s112 + $0x13] sm:$0x1]
      %v205 = vld [vmem:[%s112 + $0x17] sm:$0x1]
      %v206 = vld [vmem:[%s112 + $0x1b] sm:$0x1]
      %v207 = vld [vmem:[%s112 + $0x1f] sm:$0x1]
      %v208 = vld [vmem:[%s112 + $0x23] sm:$0x1]
      %v209 = vld [vmem:[%s112 + $0x27] sm:$0x1]
      %v210 = vld [vmem:[%s112 + $0x2b] sm:$0x1]
      %v211 = vld [vmem:[%s112 + $0x2f] sm:$0x1]
      %v212 = vld [vmem:[%s112 + $0x33] sm:$0x1]
      %v213 = vld [vmem:[%s112 + $0x37] sm:$0x1]
      %v214 = vld [vmem:[%s112 + $0x3b] sm:$0x1]
      %v215 = vld [vmem:[%s112 + $0x3f] sm:$0x1]
      %v216 = vmax.f32 %v184, %v200
      %v217 = vmax.f32 %v185, %v201
      %v218 = vmax.f32 %v186, %v202
      %v219 = vmax.f32 %v187, %v203
      %v220 = vmax.f32 %v188, %v204
      %v221 = vmax.f32 %v189, %v205
      %v222 = vmax.f32 %v190, %v206
      %v223 = vmax.f32 %v191, %v207
      %v224 = vmax.f32 %v192, %v208
      %v225 = vmax.f32 %v193, %v209
      %v226 = vmax.f32 %v194, %v210
      %v227 = vmax.f32 %v195, %v211
      %v228 = vmax.f32 %v196, %v212
      %v229 = vmax.f32 %v197, %v213
      %v230 = vmax.f32 %v198, %v214
      %v231 = vmax.f32 %v199, %v215
      %v248 = vrot.slane %v217, 7
      %vm249 = vcmask 1041409
      %v250 = vsel %vm249, %v248, %v216
      %v251 = vrot.slane %v218, 6
      %vm252 = vcmask 1042434
      %v253 = vsel %vm252, %v251, %v250
      %v254 = vrot.slane %v219, 5
      %vm255 = vcmask 1043459
      %v256 = vsel %vm255, %v254, %v253
      %v257 = vrot.slane %v220, 4
      %vm258 = vcmask 1044484
      %v259 = vsel %vm258, %v257, %v256
      %v260 = vrot.slane %v221, 3
      %vm261 = vcmask 1045509
      %v262 = vsel %vm261, %v260, %v259
      %v263 = vrot.slane %v222, 2
      %vm264 = vcmask 1046534
      %v265 = vsel %vm264, %v263, %v262
      %v266 = vrot.slane %v223, 1
      %vm267 = vcmask 1047559
      %v268 = vsel %vm267, %v266, %v265
      %v269 = vrot.slane %v225, 7
      %v270 = vsel %vm249, %v269, %v224
      %v271 = vrot.slane %v226, 6
      %v272 = vsel %vm252, %v271, %v270
      %v273 = vrot.slane %v227, 5
      %v274 = vsel %vm255, %v273, %v272
      %v275 = vrot.slane %v228, 4
      %v276 = vsel %vm258, %v275, %v274
      %v277 = vrot.slane %v229, 3
      %v278 = vsel %vm261, %v277, %v276
      %v279 = vrot.slane %v230, 2
      %v280 = vsel %vm264, %v279, %v278
      %v281 = vrot.slane %v231, 1
      %v282 = vsel %vm267, %v281, %v280
      %vm285 = vcmask 31744
      %v286 = vsel %vm285, %v268, -inf
      %287 = vmax.xlane.f32.xlu0 %v286
      %v288 = vpop.xlane.xlu0 %287
      %v289 = vsel %vm285, %v282, -inf
      %290 = vmax.xlane.f32.xlu0 %v289
      %v291 = vpop.xlane.xlu0 %290
      %vm292 = vcmask 7168
      %293 = vst.msk [vmem:[%s118] sm:$0xff] %vm292, %v288
      %294 = vst.msk [vmem:[%s118 + $0x8] sm:$0xff] %vm292, %v291
      %vm295 = vcmask 64544
      %v296 = vsel %vm295, %v268, -inf
      %297 = vmax.xlane.f32.xlu0 %v296
      %v298 = vpop.xlane.xlu0 %297
      %v299 = vsel %vm295, %v282, -inf
      %300 = vmax.xlane.f32.xlu0 %v299
      %v301 = vpop.xlane.xlu0 %300
      %vm302 = vcmask 15368
      %303 = vst.msk [vmem:[%s118] sm:$0xff] %vm302, %v298
      %304 = vst.msk [vmem:[%s118 + $0x8] sm:$0xff] %vm302, %v301
      %vm305 = vcmask 97344
      %v306 = vsel %vm305, %v268, -inf
      %307 = vmax.xlane.f32.xlu0 %v306
      %v308 = vpop.xlane.xlu0 %307
      %v309 = vsel %vm305, %v282, -inf
      %310 = vmax.xlane.f32.xlu0 %v309
      %v311 = vpop.xlane.xlu0 %310
      %vm312 = vcmask 23568
      %313 = vst.msk [vmem:[%s118] sm:$0xff] %vm312, %v308
      %314 = vst.msk [vmem:[%s118 + $0x8] sm:$0xff] %vm312, %v311
      %vm315 = vcmask 130144
      %v316 = vsel %vm315, %v268, -inf
      %317 = vmax.xlane.f32.xlu0 %v316
      %v318 = vpop.xlane.xlu0 %317
      %v319 = vsel %vm315, %v282, -inf
      %320 = vmax.xlane.f32.xlu0 %v319
      %v321 = vpop.xlane.xlu0 %320
      %vm322 = vcmask 31768
      %323 = vst.msk [vmem:[%s118] sm:$0xff] %vm322, %v318
      %324 = vst.msk [vmem:[%s118 + $0x8] sm:$0xff] %vm322, %v321
      %s325 = smul.u32 2, %s12
      %p326 = scmp.lt.s32.totalorder %s325, 3
      %s327 = scalar_select %p326, %s325, 3
      %s328 = smul.addr %s327, 8
      %s329 = scalar_lea.vmem %s1, %s328
      // Predicated region
      $region25: #{tpu_custom_call.1} parent=23 // pred_check
        %p330 = pneg %p56
      $region26: #{tpu_custom_call.1} parent=23 // pred_check_branch
        %332 = sbr.rel (%p330) target = $region28
      $region27: #{tpu_custom_call.1} parent=23 // pred_region
        %s333 = smul.u32 2, %s12
      $region28: #{tpu_custom_call.1} parent=23 // pred_fallthru
        _
    $region24: #{tpu_custom_call.1} parent=5 // pred_fallthru
      _
    %p334 = scmp.le.s32.totalorder 2, %s7
    // Predicated region
    $region29: #{tpu_custom_call.1} parent=5 // pred_check
      %p335 = pneg %p334
    $region30: #{tpu_custom_call.1} parent=5 // pred_check_branch
      %337 = sbr.rel (%p335) target = $region32
    $region31: #{tpu_custom_call.1} parent=5 // pred_region
      %s338 = ssub.s32 %s7, 2
      // Predicated region
      $region33: #{tpu_custom_call.1} parent=31 // pred_check
        %p339 = pneg %p62
      $region34: #{tpu_custom_call.1} parent=31 // pred_check_branch
        %341 = sbr.rel (%p339) target = $region36
      $region35: #{tpu_custom_call.1} parent=31 // pred_region
        %s342 = smul.u32 2, %s13
        %p343 = scmp.lt.s32.totalorder %s342, 3
        %s344 = scalar_select %p343, %s342, 3
        %s345 = smul.addr %s344, 8
        %s346 = scalar_lea.vmem %s1, %s345
      $region36: #{tpu_custom_call.1} parent=31 // pred_fallthru
        _
    $region32: #{tpu_custom_call.1} parent=5 // pred_fallthru
      _
  $region6: #{tpu_custom_call.1} parent=0 // loop_footer
    %s11 = sadd.s32 1, %s7
  $region7: #{tpu_custom_call.1} parent=0 // loop_footer_branch
    %6 = sbr.rel target = $region3
  $region8: #{tpu_custom_call.1} parent=0 // loop_exit
    _

</llo_original>
